<compile_context>
chip_gen: v5e
topology: v5e:2x2
jax: 0.10.0
libtpu: 0.0.40
codegen_flags: <defaults>
</compile_context>

<pallas_src>
import math

import jax
import jax.numpy as jnp
from jax.experimental import pallas as pl
from jax.experimental.pallas import tpu as pltpu

IN_CH = 32
SCORE_CH = 1
GEO_CH = 8
OUT_CH = GEO_CH + SCORE_CH       # fused output rows: [geo(8); score(1)]

MAX_TW = 32768                   # max pixels per tile (lane axis); multiple of 128
TARGET_PIXELS = 32768            # target pixels (batch_block * tile_width) per grid step
MAX_BATCH_BLOCK = 32             # cap on images per grid step (bounds kernel unroll)


def _output_kernel(x_ref, w_ref, b_ref, score_ref, geo_ref):
    # x: (BB, 32, TW) pixels-on-lanes; w: (9, 32); b: (9, 1)
    w = w_ref[...]
    b = b_ref[...]
    # Short static unroll over the batch block: one tiny MXU dot per image.
    # The kernel is HBM-bound (MXU/VPU/EUP nearly idle), so this is free filler.
    for i in range(x_ref.shape[0]):
        y = jnp.dot(w, x_ref[i],
                    precision=jax.lax.Precision.HIGHEST,
                    preferred_element_type=jnp.float32) + b        # (9, TW)
        # sigmoid(x) == 0.5 * tanh(0.5*x) + 0.5 : single EUP transcendental,
        # avoids a guarded exp + full-precision divide on the VALU.
        y = 0.5 * jnp.tanh(0.5 * y) + 0.5
        geo_ref[i] = y[:GEO_CH, :].astype(geo_ref.dtype)           # rows 0..7, lane-dense
        score_ref[i] = y[GEO_CH:, :].astype(score_ref.dtype)       # row 8, lane-dense


def _choose_tiling(n, hw, max_tw):
    """Pick (batch_block, tile_width); grid = (n // bb, cdiv(hw, tw))."""
    if hw > max_tw:
        # Large spatial rows: one image per step, 128-aligned max-width tiles
        # (trailing partial tile handled by Pallas boundary masking).
        return 1, max_tw
    tw = hw  # full spatial row per step (== full array dim, always legal)
    # Small spatial rows: pack several images per grid step to amortize the
    # ~0.35 us per-step overhead.  Keep bb a divisor of n (no partial blocks).
    bb = max(1, min(n, MAX_BATCH_BLOCK, TARGET_PIXELS // max(hw, 1)))
    while n % bb:
        bb -= 1
    # Guarantee >= 2 grid steps so the v7x megacore can shard across both TCs.
    if n // bb < 2:
        if n >= 2:
            bb = (n + 1) // 2
            while n % bb:
                bb -= 1
        elif hw >= 256:
            # Single image with a small row: split the pixel axis in two
            # 128-aligned tiles instead.
            tw = ((hw + 1) // 2 + 127) // 128 * 128
    return bb, tw


def fuse_params(w_score, b_score, w_geo, b_geo):
    """Fuse both 1x1 convs once at parameter-setup time (not per forward):
    rows 0..7 = geometry, row 8 = score."""
    w_fused = jnp.concatenate([w_geo, w_score], axis=0)                     # (9, 32)
    b_fused = jnp.concatenate([b_geo, b_score], axis=0).reshape(OUT_CH, 1)  # (9, 1)
    return w_fused, b_fused


def output_forward(h5, w_fused, b_fused, *, out_dtype=jnp.float32, max_tw=MAX_TW):
    """h5: (N, 32, H, W).  Returns (score (N,1,H,W), geometry (N,8,H,W))."""
    n, c, h, w = h5.shape
    assert c == IN_CH
    hw = h * w

    x = h5.reshape(n, c, hw)          # free reshape; stays NCHW, pixels on lanes

    bb, tw = _choose_tiling(n, hw, max_tw)
    grid = (n // bb, pl.cdiv(hw, tw))

    score, geo = pl.pallas_call(
        _output_kernel,
        out_shape=(
            jax.ShapeDtypeStruct((n, SCORE_CH, hw), out_dtype),
            jax.ShapeDtypeStruct((n, GEO_CH, hw), out_dtype),
        ),
        grid_spec=pltpu.PrefetchScalarGridSpec(
            num_scalar_prefetch=0,
            grid=grid,
            in_specs=[
                pl.BlockSpec((bb, IN_CH, tw), lambda i, j: (i, 0, j)),
                # Tiny weight/bias blocks: constant index_map -> DMA'd once,
                # resident across the whole grid.
                pl.BlockSpec((OUT_CH, IN_CH), lambda i, j: (0, 0)),
                pl.BlockSpec((OUT_CH, 1), lambda i, j: (0, 0)),
            ],
            out_specs=[
                pl.BlockSpec((bb, SCORE_CH, tw), lambda i, j: (i, 0, j)),
                pl.BlockSpec((bb, GEO_CH, tw), lambda i, j: (i, 0, j)),
            ],
        ),
        compiler_params=pltpu.CompilerParams(
            dimension_semantics=("parallel", "parallel"),
            vmem_limit_bytes=64 * 1024 * 1024),
    )(x, w_fused, b_fused)

    # (N, C_out, H*W) -> (N, C_out, H, W): contiguous, free.
    return score.reshape(n, SCORE_CH, h, w), geo.reshape(n, GEO_CH, h, w)


def init_params(key):
    """Deterministic Kaiming-normal (fan_out, relu) weights, zero bias,
    matching the module's explicit init.  Weights stored as (out_ch, in_ch),
    i.e. PyTorch's (out, in, 1, 1) squeezed."""
    k1, k2 = jax.random.split(key)
    std_s = math.sqrt(2.0 / SCORE_CH)   # convolution12: out_channels = 1
    std_g = math.sqrt(2.0 / GEO_CH)     # convolution13: out_channels = 8
    w_score = jax.random.normal(k1, (SCORE_CH, IN_CH), jnp.float32) * std_s
    w_geo = jax.random.normal(k2, (GEO_CH, IN_CH), jnp.float32) * std_g
    b_score = jnp.zeros((SCORE_CH,), jnp.float32)
    b_geo = jnp.zeros((GEO_CH,), jnp.float32)
    return w_score, b_score, w_geo, b_geo


if __name__ == "__main__":
    key = jax.random.PRNGKey(0)
    k_x, k_x2, k_x3, k_x4, k_p = jax.random.split(key, 5)

    w_score, b_score, w_geo, b_geo = init_params(k_p)
    w_fused, b_fused = fuse_params(w_score, b_score, w_geo, b_geo)

    def reference(h5):
        s = jax.nn.sigmoid(
            jnp.einsum("nchw,oc->nohw", h5, w_score,
                       precision=jax.lax.Precision.HIGHEST)
            + b_score[None, :, None, None])
        g = jax.nn.sigmoid(
            jnp.einsum("nchw,oc->nohw", h5, w_geo,
                       precision=jax.lax.Precision.HIGHEST)
            + b_geo[None, :, None, None])
        return s, g

    # 1) Main small shape: batch=2, 32 channels (fixed by module), 16x16 spatial.
    #    Tiling chooses bb=1, grid=(2,1) (>=2 steps for megacore).
    h5 = jax.random.normal(k_x, (2, IN_CH, 16, 16), jnp.float32)
    score_map, geometry_map = output_forward(h5, w_fused, b_fused)
    jax.block_until_ready((score_map, geometry_map))
    ref_s, ref_g = reference(h5)
    assert score_map.shape == (2, SCORE_CH, 16, 16)
    assert geometry_map.shape == (2, GEO_CH, 16, 16)
    assert jnp.allclose(score_map, ref_s, atol=2e-5)
    assert jnp.allclose(geometry_map, ref_g, atol=2e-5)

    # 2) Batched-per-step path: batch=8 of 16x16 -> bb=4, grid=(2,1).
    h5c = jax.random.normal(k_x3, (8, IN_CH, 16, 16), jnp.float32)
    s_c, g_c = output_forward(h5c, w_fused, b_fused)
    jax.block_until_ready((s_c, g_c))
    ref_sc, ref_gc = reference(h5c)
    assert jnp.allclose(s_c, ref_sc, atol=2e-5)
    assert jnp.allclose(g_c, ref_gc, atol=2e-5)

    # 3) Masked-tail / pixel-tiling path: H*W = 200 with forced 128-pixel tiles.
    h5b = jax.random.normal(k_x2, (1, IN_CH, 10, 20), jnp.float32)
    s_b, g_b = output_forward(h5b, w_fused, b_fused, max_tw=128)
    jax.block_until_ready((s_b, g_b))
    ref_sb, ref_gb = reference(h5b)
    assert jnp.allclose(s_b, ref_sb, atol=2e-5)
    assert jnp.allclose(g_b, ref_gb, atol=2e-5)

    # 4) Single-image occupancy path: n=1, hw=256 -> pixel axis split into 2 tiles.
    h5d = jax.random.normal(k_x4, (1, IN_CH, 16, 16), jnp.float32)
    s_d, g_d = output_forward(h5d, w_fused, b_fused)
    jax.block_until_ready((s_d, g_d))
    ref_sd, ref_gd = reference(h5d)
    assert jnp.allclose(s_d, ref_sd, atol=2e-5)
    assert jnp.allclose(g_d, ref_gd, atol=2e-5)

    # 5) Optional bf16-output path (cuts HBM write traffic if consumers accept it).
    s_h, g_h = output_forward(h5, w_fused, b_fused, out_dtype=jnp.bfloat16)
    jax.block_until_ready((s_h, g_h))
    assert jnp.allclose(s_h.astype(jnp.float32), ref_s, atol=1e-2)
    assert jnp.allclose(g_h.astype(jnp.float32), ref_g, atol=1e-2)

    print("KERNEL_OK")
</pallas_src>

<mosaic_0001>
module attributes {stable_mosaic.version = 11 : i64} {
  func.func @_output_kernel(%arg0: i32, %arg1: i32, %arg2: memref<1x32x256xf32, #tpu.memory_space<vmem>>, %arg3: memref<9x32xf32, #tpu.memory_space<vmem>>, %arg4: memref<9x1xf32, #tpu.memory_space<vmem>>, %arg5: memref<1x1x256xf32, #tpu.memory_space<vmem>>, %arg6: memref<1x8x256xf32, #tpu.memory_space<vmem>>) attributes {dimension_semantics = [#tpu.dimension_semantics<parallel>, #tpu.dimension_semantics<parallel>], iteration_bounds = array<i64: 2, 1>, scalar_prefetch = 0 : i64, scratch_operands = 0 : i64, tpu.core_type = #tpu.core_type<tc>, window_params = [{transform_indices = @transform_0, window_bounds = array<i64: 1, 32, 256>}, {pipeline_mode = #tpu.pipeline_mode<synchronous>, transform_indices = @transform_1, window_bounds = array<i64: 9, 32>}, {pipeline_mode = #tpu.pipeline_mode<synchronous>, transform_indices = @transform_2, window_bounds = array<i64: 9, 1>}, {transform_indices = @transform_3, window_bounds = array<i64: 1, 1, 256>}, {transform_indices = @transform_4, window_bounds = array<i64: 1, 8, 256>}]} {
    %c0 = arith.constant 0 : index
    %c0_0 = arith.constant 0 : index
    %0 = vector.load %arg3[%c0, %c0_0] : memref<9x32xf32, #tpu.memory_space<vmem>>, vector<9x32xf32>
    %c0_1 = arith.constant 0 : index
    %c0_2 = arith.constant 0 : index
    %1 = vector.load %arg4[%c0_1, %c0_2] : memref<9x1xf32, #tpu.memory_space<vmem>>, vector<9x1xf32>
    %c0_3 = arith.constant 0 : index
    %c0_4 = arith.constant 0 : index
    %c0_5 = arith.constant 0 : index
    %2 = vector.load %arg2[%c0_3, %c0_4, %c0_5] : memref<1x32x256xf32, #tpu.memory_space<vmem>>, vector<1x32x256xf32>
    %3 = vector.shape_cast %2 : vector<1x32x256xf32> to vector<32x256xf32>
    %cst = arith.constant dense<0.000000e+00> : vector<9x256xf32>
    %4 = tpu.matmul %0, %3, %cst {dimension_numbers = #tpu.dot_dimension_numbers<[1], [0], [0], [1], [0, 0, 1, 1], [], []>, precision = #tpu.contract_precision<fp32>} : vector<9x32xf32>, vector<32x256xf32>, vector<9x256xf32> -> vector<9x256xf32>
    %5 = vector.broadcast %1 : vector<9x1xf32> to vector<9x256xf32>
    %6 = arith.addf %4, %5 : vector<9x256xf32>
    %cst_6 = arith.constant 5.000000e-01 : f32
    %7 = vector.broadcast %cst_6 : f32 to vector<9x256xf32>
    %8 = arith.mulf %7, %6 : vector<9x256xf32>
    %9 = math.tanh %8 : vector<9x256xf32>
    %cst_7 = arith.constant 5.000000e-01 : f32
    %10 = vector.broadcast %cst_7 : f32 to vector<9x256xf32>
    %11 = arith.mulf %10, %9 : vector<9x256xf32>
    %cst_8 = arith.constant 5.000000e-01 : f32
    %12 = vector.broadcast %cst_8 : f32 to vector<9x256xf32>
    %13 = arith.addf %11, %12 : vector<9x256xf32>
    %14 = vector.extract_strided_slice %13 {offsets = [0, 0], sizes = [8, 256], strides = [1, 1]} : vector<9x256xf32> to vector<8x256xf32>
    %c0_9 = arith.constant 0 : index
    %c0_10 = arith.constant 0 : index
    %c0_11 = arith.constant 0 : index
    %15 = vector.load %arg6[%c0_9, %c0_10, %c0_11] : memref<1x8x256xf32, #tpu.memory_space<vmem>>, vector<1x8x256xf32>
    %16 = vector.shape_cast %15 : vector<1x8x256xf32> to vector<8x256xf32>
    %17 = vector.shape_cast %14 : vector<8x256xf32> to vector<1x8x256xf32>
    tpu.vector_store %arg6[%c0_9, %c0_10, %c0_11], %17 {strides = array<i32>} : memref<1x8x256xf32, #tpu.memory_space<vmem>>, vector<1x8x256xf32>,
    %18 = vector.extract_strided_slice %13 {offsets = [8, 0], sizes = [1, 256], strides = [1, 1]} : vector<9x256xf32> to vector<1x256xf32>
    %c0_12 = arith.constant 0 : index
    %c0_13 = arith.constant 0 : index
    %c0_14 = arith.constant 0 : index
    %19 = vector.load %arg5[%c0_12, %c0_13, %c0_14] : memref<1x1x256xf32, #tpu.memory_space<vmem>>, vector<1x1x256xf32>
    %20 = vector.shape_cast %19 : vector<1x1x256xf32> to vector<1x256xf32>
    %21 = vector.shape_cast %18 : vector<1x256xf32> to vector<1x1x256xf32>
    tpu.vector_store %arg5[%c0_12, %c0_13, %c0_14], %21 {strides = array<i32>} : memref<1x1x256xf32, #tpu.memory_space<vmem>>, vector<1x1x256xf32>,
    return
  }
  func.func @transform_0(%arg0: i32, %arg1: i32) -> (i32, i32, i32) {
    %c0_i32 = arith.constant 0 : i32
    %c0_i32_0 = arith.constant 0 : i32
    return %arg0, %c0_i32, %arg1 : i32, i32, i32
  }
  func.func @transform_1(%arg0: i32, %arg1: i32) -> (i32, i32) {
    %c0_i32 = arith.constant 0 : i32
    %c0_i32_0 = arith.constant 0 : i32
    %c0_i32_1 = arith.constant 0 : i32
    return %c0_i32, %c0_i32_0 : i32, i32
  }
  func.func @transform_2(%arg0: i32, %arg1: i32) -> (i32, i32) {
    %c0_i32 = arith.constant 0 : i32
    %c0_i32_0 = arith.constant 0 : i32
    %c0_i32_1 = arith.constant 0 : i32
    return %c0_i32, %c0_i32_0 : i32, i32
  }
  func.func @transform_3(%arg0: i32, %arg1: i32) -> (i32, i32, i32) {
    %c0_i32 = arith.constant 0 : i32
    %c0_i32_0 = arith.constant 0 : i32
    return %arg0, %c0_i32, %arg1 : i32, i32, i32
  }
  func.func @transform_4(%arg0: i32, %arg1: i32) -> (i32, i32, i32) {
    %c0_i32 = arith.constant 0 : i32
    %c0_i32_0 = arith.constant 0 : i32
    return %arg0, %c0_i32, %arg1 : i32, i32, i32
  }
}

</mosaic_0001>

<llo_original>
// kernel: tpu_custom_call.1
$region0: #{tpu_custom_call.1}
  #allocation0 [shape = 'u32[]', space=smem, size = 0x4, offset = 0x4, fixed_abs, tag = 'smem constant byte address 0x4 - core index']
  #allocation1 [shape = 'u32[72,128]{1,0:T(1,128)}', space=vmem, size = 0x9000, scoped, tag = 'internal scratch']
  %s0 = inlined_call_operand.hbm [shape: f32[2,32,256], index: 0, kind: input, shape index: {}]
  %s1 = inlined_call_operand.vmem [shape: f32[9,32], index: 1, kind: input, shape index: {}]
  %s2 = inlined_call_operand.vmem [shape: f32[9,1], index: 2, kind: input, shape index: {}]
  %s3 = inlined_call_operand.hbm [shape: f32[2,1,256], index: 3, kind: output, shape index: {0}]
  %s4 = inlined_call_operand.hbm [shape: f32[2,8,256], index: 4, kind: output, shape index: {1}]
  %5 = xla_tuple %s3, %s4
  %s6 = sld [smem:[#allocation0]]
  $region57: #{tpu_custom_call.1} parent=0
    _
  %s8 = ssub.s32 1, %s6
  %s9 = scalar_select 0, %s8, %s6
  $region1: #{tpu_custom_call.1} parent=0
    #allocation2 [shape = 'u8[65536]{0}', space=vmem, size = 0x10000, scoped, tag = 'input window, operand 0']
    #allocation3 [shape = 's32[2]{0}', space=sflag, size = 0x8, scoped, tag = 'scoped memory for tpu_custom_call.1']
    #allocation4 [shape = 's32[2]{0}', space=sflag, size = 0x8, scoped, tag = 'scoped memory for tpu_custom_call.1']
    #allocation5 [shape = 'u8[2048]{0}', space=vmem, size = 0x800, scoped, tag = 'output window, operand 0']
    #allocation6 [shape = 'u8[16384]{0}', space=vmem, size = 0x4000, scoped, tag = 'output window, operand 1']
    #allocation7 [shape = 's32[2]{0}', space=sflag, size = 0x8, scoped, tag = 'scoped memory for tpu_custom_call.1']
    %10 = vsyncpa [#allocation3], 0
    %s11 = scalar_lea.sflag [#allocation3], 1
    %12 = vsyncpa %s11, 0
    %13 = vsyncpa [#allocation4], 0
    %s14 = scalar_lea.sflag [#allocation4], 1
    %15 = vsyncpa %s14, 0
    %16 = vsyncpa [#allocation7], 0
    %s17 = scalar_lea.sflag [#allocation7], 1
    %18 = vsyncpa %s17, 0
    loop: start=0, step=1, limit=4
    $region2: #{tpu_custom_call.1} parent=1 // loop_pre_header
      _
    $region3: #{tpu_custom_call.1} parent=1 // loop_header
      %s20 = sphi 0, %s24
      %p21 = scmp.ge.s32.totalorder %s20, 4
      %s27 = sphi 0, %s39
      %s28 = sphi 0, %s35
      %s29 = sphi 0, %s27
      %s30 = sphi 0, %s28
      %s31 = sphi 0, %s29
      %s32 = sphi 0, %s30
      %s44 = sphi 0, %s46
      %s47 = sphi 0, %s44
      %s48 = sphi 0, %s47
      %s64 = sphi 0, %s48
      %s68 = sphi 0, %s68
      %s70 = sphi 0, %s68
      %s71 = sphi 0, %s70
      %s85 = sphi 0, %s71
      %s89 = sphi 0, %s89
      %s91 = sphi 0, %s89
      %s92 = sphi 0, %s91
      %s106 = sphi 0, %s92
      %s114 = sphi 0, %s116
      %s117 = sphi 0, %s114
      %s118 = sphi 0, %s117
      %s134 = sphi 0, %s118
      %s142 = sphi 0, %s144
      %s145 = sphi 0, %s142
      %s146 = sphi 0, %s145
      %s162 = sphi 0, %s146
    $region4: #{tpu_custom_call.1} parent=1 // loop_header_branch
      %23 = sbr.rel (%p21) target = $region8
    $region5: #{tpu_custom_call.1} parent=1 // loop_body
      %s25 = ssub.s32 %s20, 1
      %s26 = ssub.s32 %s20, 2
      %s33 = sadd.s32 1, %s28
      %p34 = scmp.ge.s32.totalorder %s33, 1
      %s35 = scalar_select %p34, 0, %s33
      %s36 = sadd.s32 1, %s27
      %s37 = scalar_select %p34, %s36, %s27
      %p38 = scmp.ge.s32.totalorder %s37, 2
      %s39 = scalar_select %p38, 0, %s37
      %s40 = ssub.s32 %s27, %s39
      %s41 = ssub.s32 %s28, %s35
      %s42 = sor.u32 %s40, %s41
      %p43 = scmp.eq.s32.totalorder %s42, 0
      %s45 = sadd.s32 %s44, 1
      %s46 = scalar_select %p43, %s44, %s45
      %p49 = pneg %p43
      %p50 = scmp.eq.s32.totalorder %s20, 1
      %p51 = por %p49, %p50
      %p52 = scmp.ne.s32.totalorder %s44, %s47
      %p53 = scmp.eq.s32.totalorder %s20, 0
      %p54 = por %p52, %p53
      %p55 = scmp.ne.s32.totalorder %s44, %s47
      %p56 = scmp.eq.s32.totalorder %s25, 1
      %p57 = por %p55, %p56
      %p58 = scmp.ne.s32.totalorder %s47, %s48
      %p59 = scmp.eq.s32.totalorder %s25, 0
      %p60 = por %p58, %p59
      %p61 = scmp.ne.s32.totalorder %s47, %s48
      %p62 = scmp.eq.s32.totalorder %s26, 1
      %p63 = por %p61, %p62
      %p65 = scmp.ne.s32.totalorder %s48, %s64
      %p66 = scmp.eq.s32.totalorder %s26, 0
      %p67 = por %p65, %p66
      %s69 = sadd.s32 %s68, 1
      %p72 = scmp.eq.s32.totalorder %s20, 1
      %p73 = scmp.ne.s32.totalorder %s68, %s70
      %p74 = scmp.eq.s32.totalorder %s20, 0
      %p75 = por %p73, %p74
      %p76 = scmp.ne.s32.totalorder %s68, %s70
      %p77 = scmp.eq.s32.totalorder %s25, 1
      %p78 = por %p76, %p77
      %p79 = scmp.ne.s32.totalorder %s70, %s71
      %p80 = scmp.eq.s32.totalorder %s25, 0
      %p81 = por %p79, %p80
      %p82 = scmp.ne.s32.totalorder %s70, %s71
      %p83 = scmp.eq.s32.totalorder %s26, 1
      %p84 = por %p82, %p83
      %p86 = scmp.ne.s32.totalorder %s71, %s85
      %p87 = scmp.eq.s32.totalorder %s26, 0
      %p88 = por %p86, %p87
      %s90 = sadd.s32 %s89, 1
      %p93 = scmp.eq.s32.totalorder %s20, 1
      %p94 = scmp.ne.s32.totalorder %s89, %s91
      %p95 = scmp.eq.s32.totalorder %s20, 0
      %p96 = por %p94, %p95
      %p97 = scmp.ne.s32.totalorder %s89, %s91
      %p98 = scmp.eq.s32.totalorder %s25, 1
      %p99 = por %p97, %p98
      %p100 = scmp.ne.s32.totalorder %s91, %s92
      %p101 = scmp.eq.s32.totalorder %s25, 0
      %p102 = por %p100, %p101
      %p103 = scmp.ne.s32.totalorder %s91, %s92
      %p104 = scmp.eq.s32.totalorder %s26, 1
      %p105 = por %p103, %p104
      %p107 = scmp.ne.s32.totalorder %s92, %s106
      %p108 = scmp.eq.s32.totalorder %s26, 0
      %p109 = por %p107, %p108
      %s110 = ssub.s32 %s27, %s39
      %s111 = ssub.s32 %s28, %s35
      %s112 = sor.u32 %s110, %s111
      %p113 = scmp.eq.s32.totalorder %s112, 0
      %s115 = sadd.s32 %s114, 1
      %s116 = scalar_select %p113, %s114, %s115
      %p119 = pneg %p113
      %p120 = scmp.eq.s32.totalorder %s20, 1
      %p121 = por %p119, %p120
      %p122 = scmp.ne.s32.totalorder %s114, %s117
      %p123 = scmp.eq.s32.totalorder %s20, 0
      %p124 = por %p122, %p123
      %p125 = scmp.ne.s32.totalorder %s114, %s117
      %p126 = scmp.eq.s32.totalorder %s25, 1
      %p127 = por %p125, %p126
      %p128 = scmp.ne.s32.totalorder %s117, %s118
      %p129 = scmp.eq.s32.totalorder %s25, 0
      %p130 = por %p128, %p129
      %p131 = scmp.ne.s32.totalorder %s117, %s118
      %p132 = scmp.eq.s32.totalorder %s26, 1
      %p133 = por %p131, %p132
      %p135 = scmp.ne.s32.totalorder %s118, %s134
      %p136 = scmp.eq.s32.totalorder %s26, 0
      %p137 = por %p135, %p136
      %s138 = ssub.s32 %s27, %s39
      %s139 = ssub.s32 %s28, %s35
      %s140 = sor.u32 %s138, %s139
      %p141 = scmp.eq.s32.totalorder %s140, 0
      %s143 = sadd.s32 %s142, 1
      %s144 = scalar_select %p141, %s142, %s143
      %p147 = pneg %p141
      %p148 = scmp.eq.s32.totalorder %s20, 1
      %p149 = por %p147, %p148
      %p150 = scmp.ne.s32.totalorder %s142, %s145
      %p151 = scmp.eq.s32.totalorder %s20, 0
      %p152 = por %p150, %p151
      %p153 = scmp.ne.s32.totalorder %s142, %s145
      %p154 = scmp.eq.s32.totalorder %s25, 1
      %p155 = por %p153, %p154
      %p156 = scmp.ne.s32.totalorder %s145, %s146
      %p157 = scmp.eq.s32.totalorder %s25, 0
      %p158 = por %p156, %p157
      %p159 = scmp.ne.s32.totalorder %s145, %s146
      %p160 = scmp.eq.s32.totalorder %s26, 1
      %p161 = por %p159, %p160
      %p163 = scmp.ne.s32.totalorder %s146, %s162
      %p164 = scmp.eq.s32.totalorder %s26, 0
      %p165 = por %p163, %p164
      %p166 = scmp.le.s32.totalorder 1, %s20
      %p167 = scmp.lt.s32.totalorder %s20, 3
      %p168 = pnand %p166, %p167
      %p169 = pneg %p168
      // Predicated region
      $region9: #{tpu_custom_call.1} parent=5 // pred_check
        _
      $region10: #{tpu_custom_call.1} parent=5 // pred_check_branch
        %171 = sbr.rel (%p168) target = $region12
      $region11: #{tpu_custom_call.1} parent=5 // pred_region
        %s172 = ssub.s32 %s20, 1
        // Predicated region
        $region13: #{tpu_custom_call.1} parent=11 // pred_check
          %p173 = pneg %p81
        $region14: #{tpu_custom_call.1} parent=11 // pred_check_branch
          %175 = sbr.rel (%p173) target = $region16
        $region15: #{tpu_custom_call.1} parent=11 // pred_region
          _
        $region16: #{tpu_custom_call.1} parent=11 // pred_fallthru
          _
        // Predicated region
        $region17: #{tpu_custom_call.1} parent=11 // pred_check
          %p176 = pneg %p102
        $region18: #{tpu_custom_call.1} parent=11 // pred_check_branch
          %178 = sbr.rel (%p176) target = $region20
        $region19: #{tpu_custom_call.1} parent=11 // pred_region
          _
        $region20: #{tpu_custom_call.1} parent=11 // pred_fallthru
          _
      $region12: #{tpu_custom_call.1} parent=5 // pred_fallthru
        _
      %p179 = scmp.lt.s32.totalorder %s20, 2
      // Predicated region
      $region21: #{tpu_custom_call.1} parent=5 // pred_check
        %p180 = pneg %p179
      $region22: #{tpu_custom_call.1} parent=5 // pred_check_branch
        %182 = sbr.rel (%p180) target = $region24
      $region23: #{tpu_custom_call.1} parent=5 // pred_region
        // Predicated region
        $region25: #{tpu_custom_call.1} parent=23 // pred_check
          %p183 = pneg %p54
        $region26: #{tpu_custom_call.1} parent=23 // pred_check_branch
          %185 = sbr.rel (%p183) target = $region28
        $region27: #{tpu_custom_call.1} parent=23 // pred_region
          %s186 = sand.u32 %s44, 1
          %s187 = scalar_lea.sflag [#allocation3], %s186
          %s188 = sand.u32 %s44, 1
          %s189 = smul.addr %s188, 64
          %s190 = scalar_lea.vmem [#allocation2], %s189
          %s191 = smul.u32 2, %s28
          %193 = vsyncadd %s187, 0
          %s194 = smul.addr %s27, 8
          %s195 = sadd.s32 %s191, %s194
          %s196 = smul.addr %s195, 8
          %s197 = scalar_lea.hbm %s0, %s196
          %s198 = sshll.u32 %s197, 4
          %s199 = int_to_ptr.hbm [resolvable:$true] %s198
          %s200 = sshll.u32 %s190, 4
          %s201 = int_to_ptr.vmem [resolvable:$true] %s200
          %206 = dma.hbm_to_vmem [thread:$0]  %s199, 1024, %s201, %s187, 256, 256, 16
        $region28: #{tpu_custom_call.1} parent=23 // pred_fallthru
          _
      $region24: #{tpu_custom_call.1} parent=5 // pred_fallthru
        _
      %p207 = scmp.le.s32.totalorder 1, %s20
      %p208 = scmp.lt.s32.totalorder %s20, 3
      %p209 = pnand %p207, %p208
      %p210 = pneg %p209
      // Predicated region
      $region29: #{tpu_custom_call.1} parent=5 // pred_check
        _
      $region30: #{tpu_custom_call.1} parent=5 // pred_check_branch
        %212 = sbr.rel (%p209) target = $region32
      $region31: #{tpu_custom_call.1} parent=5 // pred_region
        %s213 = ssub.s32 %s20, 1
        %s214 = sand.u32 %s47, 1
        %s215 = scalar_lea.sflag [#allocation3], %s214
        %s216 = sand.u32 %s47, 1
        %s217 = smul.addr %s216, 64
        %s218 = scalar_lea.vmem [#allocation2], %s217
        // Predicated region
        $region33: #{tpu_custom_call.1} parent=31 // pred_check
          %p219 = pneg %p60
        $region34: #{tpu_custom_call.1} parent=31 // pred_check_branch
          %221 = sbr.rel (%p219) target = $region36
        $region35: #{tpu_custom_call.1} parent=31 // pred_region
          %223 = dma.done %s215, 1024
        $region36: #{tpu_custom_call.1} parent=31 // pred_fallthru
          _
        %s224 = sand.u32 %s47, 1
        %s225 = scalar_lea.sflag [#allocation3], %s224
        %s226 = sand.u32 %s47, 1
        %s227 = smul.addr %s226, 64
        %s228 = scalar_lea.vmem [#allocation2], %s227
        %p229 = pneg %p60
        %p230 = pneg %p57
        %p231 = pneg %p81
        %p232 = pneg %p78
        %p233 = pneg %p102
        %p234 = pneg %p99
        %p235 = pneg %p130
        %p236 = pneg %p127
        %s237 = sand.u32 %s117, 1
        %s238 = scalar_lea.sflag [#allocation4], %s237
        %s239 = sand.u32 %s117, 1
        %s240 = smul.addr %s239, 2
        %s241 = scalar_lea.vmem [#allocation5], %s240
        %p242 = pneg %p158
        %p243 = pneg %p155
        %s244 = sand.u32 %s145, 1
        %s245 = scalar_lea.sflag [#allocation7], %s244
        %s246 = sand.u32 %s145, 1
        %s247 = smul.addr %s246, 16
        %s248 = scalar_lea.vmem [#allocation6], %s247
        %s249 = smul.u32 2, %s30
        %s250 = smul.u32 2, %s30
        %s251 = smul.u32 2, %s30
        %v252 = vld [vmem:[%s1] sm:$0xff]
        %v253 = vld [vmem:[%s1 + $0x8] sm:$0x1]
        %v254 = vld [vmem:[%s2] sm:$0xff]
        %v255 = vld [vmem:[%s2 + $0x8] sm:$0x1]
        %v256 = vld [vmem:[%s218] sm:$0xff]
        %v257 = vld [vmem:[%s218 + $0x8] sm:$0xff]
        %v258 = vld [vmem:[%s218 + $0x10] sm:$0xff]
        %v259 = vld [vmem:[%s218 + $0x18] sm:$0xff]
        %v260 = vld [vmem:[%s218 + $0x20] sm:$0xff]
        %v261 = vld [vmem:[%s218 + $0x28] sm:$0xff]
        %v262 = vld [vmem:[%s218 + $0x30] sm:$0xff]
        %v263 = vld [vmem:[%s218 + $0x38] sm:$0xff]
        %265 = vset.pattern.permute.xlu0 0
        %266 = vperm.xlu0 %265, %v254
        %v267 = vpop.permute.xlu0 %266
        %270 = vset.pattern.permute.xlu0 0
        %271 = vperm.xlu0 %270, %v255
        %v272 = vpop.permute.xlu0 %271
        %vm274 = vcmask 261120
        %v276 = vsel %vm274, %v252, 0
        %v279 = vsel %vm274, %v253, 0
        %281 = vmatpush.msra.mxu0 0.0
        %282 = vmatpush.msra.mxu0 0.0
        %283 = vmatpush.msra.mxu0 0.0
        %284 = vmatpush.msra.mxu0 0.0
        %285 = vmatpush.msra.mxu0 0.0
        %286 = vmatpush.msra.mxu0 0.0
        %287 = vmatpush.msra.mxu0 0.0
        %288 = vmatpush.msra.mxu0 0.0
        %289 = vmatpush.msra.mxu0 0.0
        %290 = vmatpush.msra.mxu0 0.0
        %291 = vmatpush.msra.mxu0 0.0
        %292 = vmatpush.msra.mxu0 0.0
        %v293 = vand.u32 %v262, 4294901760
        %294 = vmatpush.msra.mxu0 %v293
        %v295 = vand.u32 %v260, 4294901760
        %296 = vmatpush.msra.mxu0 %v295
        %v297 = vand.u32 %v258, 4294901760
        %298 = vmatpush.msra.mxu0 %v297
        %v299 = vand.u32 %v256, 4294901760
        %300 = vmatpush.msra.mxu0 %v299
        %v301 = vand.u32 %v276, 4294901760
        %v302 = vsub.f32 %v276, %v301
        %v303 = vand.u32 %v302, 4294901760
        %v304 = vsub.f32 %v302, %v303
        %v305 = vand.u32 %v304, 4294901760
        %306 = vmatmul.f32.gmra.mxu0 %v305
        %v307 = vpop.f32.mrf.mxu0
        %v308 = vadd.f32 %v267, %v307
        %v309 = vand.u32 %v279, 4294901760
        %v310 = vsub.f32 %v279, %v309
        %v311 = vand.u32 %v310, 4294901760
        %v312 = vsub.f32 %v310, %v311
        %v313 = vand.u32 %v312, 4294901760
        %314 = vmatmul.f32.gmra.mxu0 %v313
        %v315 = vpop.f32.mrf.mxu0
        %v316 = vadd.f32 %v272, %v315
        %317 = vdwg.mxu0
        %318 = vmatpush.msra.mxu0 0.0
        %319 = vmatpush.msra.mxu0 0.0
        %320 = vmatpush.msra.mxu0 0.0
        %321 = vmatpush.msra.mxu0 0.0
        %322 = vmatpush.msra.mxu0 0.0
        %323 = vmatpush.msra.mxu0 0.0
        %324 = vmatpush.msra.mxu0 0.0
        %325 = vmatpush.msra.mxu0 0.0
        %326 = vmatpush.msra.mxu0 0.0
        %327 = vmatpush.msra.mxu0 0.0
        %328 = vmatpush.msra.mxu0 0.0
        %329 = vmatpush.msra.mxu0 0.0
        %v330 = vand.u32 %v262, 4294901760
        %v331 = vsub.f32 %v262, %v330
        %v332 = vand.u32 %v331, 4294901760
        %v333 = vsub.f32 %v331, %v332
        %v334 = vand.u32 %v333, 4294901760
        %335 = vmatpush.msra.mxu0 %v334
        %v336 = vand.u32 %v260, 4294901760
        %v337 = vsub.f32 %v260, %v336
        %v338 = vand.u32 %v337, 4294901760
        %v339 = vsub.f32 %v337, %v338
        %v340 = vand.u32 %v339, 4294901760
        %341 = vmatpush.msra.mxu0 %v340
        %v342 = vand.u32 %v258, 4294901760
        %v343 = vsub.f32 %v258, %v342
        %v344 = vand.u32 %v343, 4294901760
        %v345 = vsub.f32 %v343, %v344
        %v346 = vand.u32 %v345, 4294901760
        %347 = vmatpush.msra.mxu0 %v346
        %v348 = vand.u32 %v256, 4294901760
        %v349 = vsub.f32 %v256, %v348
        %v350 = vand.u32 %v349, 4294901760
        %v351 = vsub.f32 %v349, %v350
        %v352 = vand.u32 %v351, 4294901760
        %353 = vmatpush.msra.mxu0 %v352
        %v354 = vand.u32 %v276, 4294901760
        %355 = vmatmul.f32.gmra.mxu0 %v354
        %v356 = vpop.f32.mrf.mxu0
        %v357 = vadd.f32 %v308, %v356
        %v358 = vand.u32 %v279, 4294901760
        %359 = vmatmul.f32.gmra.mxu0 %v358
        %v360 = vpop.f32.mrf.mxu0
        %v361 = vadd.f32 %v316, %v360
        %362 = vdwg.mxu0
        %363 = vmatpush.msra.mxu0 0.0
        %364 = vmatpush.msra.mxu0 0.0
        %365 = vmatpush.msra.mxu0 0.0
        %366 = vmatpush.msra.mxu0 0.0
        %367 = vmatpush.msra.mxu0 0.0
        %368 = vmatpush.msra.mxu0 0.0
        %369 = vmatpush.msra.mxu0 0.0
        %370 = vmatpush.msra.mxu0 0.0
        %371 = vmatpush.msra.mxu0 0.0
        %372 = vmatpush.msra.mxu0 0.0
        %373 = vmatpush.msra.mxu0 0.0
        %374 = vmatpush.msra.mxu0 0.0
        %v375 = vand.u32 %v262, 4294901760
        %v376 = vsub.f32 %v262, %v375
        %377 = vmatpush.msra.mxu0 %v376
        %v378 = vand.u32 %v260, 4294901760
        %v379 = vsub.f32 %v260, %v378
        %380 = vmatpush.msra.mxu0 %v379
        %v381 = vand.u32 %v258, 4294901760
        %v382 = vsub.f32 %v258, %v381
        %383 = vmatpush.msra.mxu0 %v382
        %v384 = vand.u32 %v256, 4294901760
        %v385 = vsub.f32 %v256, %v384
        %386 = vmatpush.msra.mxu0 %v385
        %v387 = vand.u32 %v276, 4294901760
        %v388 = vsub.f32 %v276, %v387
        %389 = vmatmul.f32.gmra.mxu0 %v388
        %v390 = vpop.f32.mrf.mxu0
        %v391 = vadd.f32 %v357, %v390
        %v392 = vand.u32 %v279, 4294901760
        %v393 = vsub.f32 %v279, %v392
        %394 = vmatmul.f32.gmra.mxu0 %v393
        %v395 = vpop.f32.mrf.mxu0
        %v396 = vadd.f32 %v361, %v395
        %397 = vdwg.mxu0
        %398 = vmatpush.msra.mxu0 0.0
        %399 = vmatpush.msra.mxu0 0.0
        %400 = vmatpush.msra.mxu0 0.0
        %401 = vmatpush.msra.mxu0 0.0
        %402 = vmatpush.msra.mxu0 0.0
        %403 = vmatpush.msra.mxu0 0.0
        %404 = vmatpush.msra.mxu0 0.0
        %405 = vmatpush.msra.mxu0 0.0
        %406 = vmatpush.msra.mxu0 0.0
        %407 = vmatpush.msra.mxu0 0.0
        %408 = vmatpush.msra.mxu0 0.0
        %409 = vmatpush.msra.mxu0 0.0
        %v410 = vand.u32 %v262, 4294901760
        %411 = vmatpush.msra.mxu0 %v410
        %v412 = vand.u32 %v260, 4294901760
        %413 = vmatpush.msra.mxu0 %v412
        %v414 = vand.u32 %v258, 4294901760
        %415 = vmatpush.msra.mxu0 %v414
        %v416 = vand.u32 %v256, 4294901760
        %417 = vmatpush.msra.mxu0 %v416
        %v418 = vand.u32 %v276, 4294901760
        %v419 = vsub.f32 %v276, %v418
        %v420 = vand.u32 %v419, 4294901760
        %421 = vmatmul.f32.gmra.mxu0 %v420
        %v422 = vpop.f32.mrf.mxu0
        %v423 = vadd.f32 %v391, %v422
        %v424 = vand.u32 %v279, 4294901760
        %v425 = vsub.f32 %v279, %v424
        %v426 = vand.u32 %v425, 4294901760
        %427 = vmatmul.f32.gmra.mxu0 %v426
        %v428 = vpop.f32.mrf.mxu0
        %v429 = vadd.f32 %v396, %v428
        %430 = vdwg.mxu0
        %431 = vmatpush.msra.mxu0 0.0
        %432 = vmatpush.msra.mxu0 0.0
        %433 = vmatpush.msra.mxu0 0.0
        %434 = vmatpush.msra.mxu0 0.0
        %435 = vmatpush.msra.mxu0 0.0
        %436 = vmatpush.msra.mxu0 0.0
        %437 = vmatpush.msra.mxu0 0.0
        %438 = vmatpush.msra.mxu0 0.0
        %439 = vmatpush.msra.mxu0 0.0
        %440 = vmatpush.msra.mxu0 0.0
        %441 = vmatpush.msra.mxu0 0.0
        %442 = vmatpush.msra.mxu0 0.0
        %v443 = vand.u32 %v262, 4294901760
        %v444 = vsub.f32 %v262, %v443
        %v445 = vand.u32 %v444, 4294901760
        %446 = vmatpush.msra.mxu0 %v445
        %v447 = vand.u32 %v260, 4294901760
        %v448 = vsub.f32 %v260, %v447
        %v449 = vand.u32 %v448, 4294901760
        %450 = vmatpush.msra.mxu0 %v449
        %v451 = vand.u32 %v258, 4294901760
        %v452 = vsub.f32 %v258, %v451
        %v453 = vand.u32 %v452, 4294901760
        %454 = vmatpush.msra.mxu0 %v453
        %v455 = vand.u32 %v256, 4294901760
        %v456 = vsub.f32 %v256, %v455
        %v457 = vand.u32 %v456, 4294901760
        %458 = vmatpush.msra.mxu0 %v457
        %v459 = vand.u32 %v276, 4294901760
        %460 = vmatmul.f32.gmra.mxu0 %v459
        %v461 = vpop.f32.mrf.mxu0
        %v462 = vadd.f32 %v423, %v461
        %v463 = vand.u32 %v279, 4294901760
        %464 = vmatmul.f32.gmra.mxu0 %v463
        %v465 = vpop.f32.mrf.mxu0
        %v466 = vadd.f32 %v429, %v465
        %467 = vdwg.mxu0
        %468 = vmatpush.msra.mxu0 0.0
        %469 = vmatpush.msra.mxu0 0.0
        %470 = vmatpush.msra.mxu0 0.0
        %471 = vmatpush.msra.mxu0 0.0
        %472 = vmatpush.msra.mxu0 0.0
        %473 = vmatpush.msra.mxu0 0.0
        %474 = vmatpush.msra.mxu0 0.0
        %475 = vmatpush.msra.mxu0 0.0
        %476 = vmatpush.msra.mxu0 0.0
        %477 = vmatpush.msra.mxu0 0.0
        %478 = vmatpush.msra.mxu0 0.0
        %479 = vmatpush.msra.mxu0 0.0
        %v480 = vand.u32 %v262, 4294901760
        %481 = vmatpush.msra.mxu0 %v480
        %v482 = vand.u32 %v260, 4294901760
        %483 = vmatpush.msra.mxu0 %v482
        %v484 = vand.u32 %v258, 4294901760
        %485 = vmatpush.msra.mxu0 %v484
        %v486 = vand.u32 %v256, 4294901760
        %487 = vmatpush.msra.mxu0 %v486
        %v488 = vand.u32 %v276, 4294901760
        %489 = vmatmul.f32.gmra.mxu0 %v488
        %v490 = vpop.f32.mrf.mxu0
        %v491 = vadd.f32 %v462, %v490
        %v492 = vand.u32 %v279, 4294901760
        %493 = vmatmul.f32.gmra.mxu0 %v492
        %v494 = vpop.f32.mrf.mxu0
        %v495 = vadd.f32 %v466, %v494
        %496 = vdwg.mxu0
        %497 = vmatpush.msra.mxu0 0.0
        %498 = vmatpush.msra.mxu0 0.0
        %499 = vmatpush.msra.mxu0 0.0
        %500 = vmatpush.msra.mxu0 0.0
        %501 = vmatpush.msra.mxu0 0.0
        %502 = vmatpush.msra.mxu0 0.0
        %503 = vmatpush.msra.mxu0 0.0
        %504 = vmatpush.msra.mxu0 0.0
        %505 = vmatpush.msra.mxu0 0.0
        %506 = vmatpush.msra.mxu0 0.0
        %507 = vmatpush.msra.mxu0 0.0
        %508 = vmatpush.msra.mxu0 0.0
        %v509 = vand.u32 %v263, 4294901760
        %510 = vmatpush.msra.mxu0 %v509
        %v511 = vand.u32 %v261, 4294901760
        %512 = vmatpush.msra.mxu0 %v511
        %v513 = vand.u32 %v259, 4294901760
        %514 = vmatpush.msra.mxu0 %v513
        %v515 = vand.u32 %v257, 4294901760
        %516 = vmatpush.msra.mxu0 %v515
        %v517 = vand.u32 %v276, 4294901760
        %v518 = vsub.f32 %v276, %v517
        %v519 = vand.u32 %v518, 4294901760
        %v520 = vsub.f32 %v518, %v519
        %v521 = vand.u32 %v520, 4294901760
        %522 = vmatmul.f32.gmra.mxu0 %v521
        %v523 = vpop.f32.mrf.mxu0
        %v524 = vadd.f32 %v267, %v523
        %v525 = vand.u32 %v279, 4294901760
        %v526 = vsub.f32 %v279, %v525
        %v527 = vand.u32 %v526, 4294901760
        %v528 = vsub.f32 %v526, %v527
        %v529 = vand.u32 %v528, 4294901760
        %530 = vmatmul.f32.gmra.mxu0 %v529
        %v531 = vpop.f32.mrf.mxu0
        %v532 = vadd.f32 %v272, %v531
        %533 = vdwg.mxu0
        %534 = vmatpush.msra.mxu0 0.0
        %535 = vmatpush.msra.mxu0 0.0
        %536 = vmatpush.msra.mxu0 0.0
        %537 = vmatpush.msra.mxu0 0.0
        %538 = vmatpush.msra.mxu0 0.0
        %539 = vmatpush.msra.mxu0 0.0
        %540 = vmatpush.msra.mxu0 0.0
        %541 = vmatpush.msra.mxu0 0.0
        %542 = vmatpush.msra.mxu0 0.0
        %543 = vmatpush.msra.mxu0 0.0
        %544 = vmatpush.msra.mxu0 0.0
        %545 = vmatpush.msra.mxu0 0.0
        %v546 = vand.u32 %v263, 4294901760
        %v547 = vsub.f32 %v263, %v546
        %v548 = vand.u32 %v547, 4294901760
        %v549 = vsub.f32 %v547, %v548
        %v550 = vand.u32 %v549, 4294901760
        %551 = vmatpush.msra.mxu0 %v550
        %v552 = vand.u32 %v261, 4294901760
        %v553 = vsub.f32 %v261, %v552
        %v554 = vand.u32 %v553, 4294901760
        %v555 = vsub.f32 %v553, %v554
        %v556 = vand.u32 %v555, 4294901760
        %557 = vmatpush.msra.mxu0 %v556
        %v558 = vand.u32 %v259, 4294901760
        %v559 = vsub.f32 %v259, %v558
        %v560 = vand.u32 %v559, 4294901760
        %v561 = vsub.f32 %v559, %v560
        %v562 = vand.u32 %v561, 4294901760
        %563 = vmatpush.msra.mxu0 %v562
        %v564 = vand.u32 %v257, 4294901760
        %v565 = vsub.f32 %v257, %v564
        %v566 = vand.u32 %v565, 4294901760
        %v567 = vsub.f32 %v565, %v566
        %v568 = vand.u32 %v567, 4294901760
        %569 = vmatpush.msra.mxu0 %v568
        %v570 = vand.u32 %v276, 4294901760
        %571 = vmatmul.f32.gmra.mxu0 %v570
        %v572 = vpop.f32.mrf.mxu0
        %v573 = vadd.f32 %v524, %v572
        %v574 = vand.u32 %v279, 4294901760
        %575 = vmatmul.f32.gmra.mxu0 %v574
        %v576 = vpop.f32.mrf.mxu0
        %v577 = vadd.f32 %v532, %v576
        %578 = vdwg.mxu0
        %579 = vmatpush.msra.mxu0 0.0
        %580 = vmatpush.msra.mxu0 0.0
        %581 = vmatpush.msra.mxu0 0.0
        %582 = vmatpush.msra.mxu0 0.0
        %583 = vmatpush.msra.mxu0 0.0
        %584 = vmatpush.msra.mxu0 0.0
        %585 = vmatpush.msra.mxu0 0.0
        %586 = vmatpush.msra.mxu0 0.0
        %587 = vmatpush.msra.mxu0 0.0
        %588 = vmatpush.msra.mxu0 0.0
        %589 = vmatpush.msra.mxu0 0.0
        %590 = vmatpush.msra.mxu0 0.0
        %v591 = vand.u32 %v263, 4294901760
        %v592 = vsub.f32 %v263, %v591
        %593 = vmatpush.msra.mxu0 %v592
        %v594 = vand.u32 %v261, 4294901760
        %v595 = vsub.f32 %v261, %v594
        %596 = vmatpush.msra.mxu0 %v595
        %v597 = vand.u32 %v259, 4294901760
        %v598 = vsub.f32 %v259, %v597
        %599 = vmatpush.msra.mxu0 %v598
        %v600 = vand.u32 %v257, 4294901760
        %v601 = vsub.f32 %v257, %v600
        %602 = vmatpush.msra.mxu0 %v601
        %v603 = vand.u32 %v276, 4294901760
        %v604 = vsub.f32 %v276, %v603
        %605 = vmatmul.f32.gmra.mxu0 %v604
        %v606 = vpop.f32.mrf.mxu0
        %v607 = vadd.f32 %v573, %v606
        %v608 = vand.u32 %v279, 4294901760
        %v609 = vsub.f32 %v279, %v608
        %610 = vmatmul.f32.gmra.mxu0 %v609
        %v611 = vpop.f32.mrf.mxu0
        %v612 = vadd.f32 %v577, %v611
        %613 = vdwg.mxu0
        %614 = vmatpush.msra.mxu0 0.0
        %615 = vmatpush.msra.mxu0 0.0
        %616 = vmatpush.msra.mxu0 0.0
        %617 = vmatpush.msra.mxu0 0.0
        %618 = vmatpush.msra.mxu0 0.0
        %619 = vmatpush.msra.mxu0 0.0
        %620 = vmatpush.msra.mxu0 0.0
        %621 = vmatpush.msra.mxu0 0.0
        %622 = vmatpush.msra.mxu0 0.0
        %623 = vmatpush.msra.mxu0 0.0
        %624 = vmatpush.msra.mxu0 0.0
        %625 = vmatpush.msra.mxu0 0.0
        %v626 = vand.u32 %v263, 4294901760
        %627 = vmatpush.msra.mxu0 %v626
        %v628 = vand.u32 %v261, 4294901760
        %629 = vmatpush.msra.mxu0 %v628
        %v630 = vand.u32 %v259, 4294901760
        %631 = vmatpush.msra.mxu0 %v630
        %v632 = vand.u32 %v257, 4294901760
        %633 = vmatpush.msra.mxu0 %v632
        %v634 = vand.u32 %v276, 4294901760
        %v635 = vsub.f32 %v276, %v634
        %v636 = vand.u32 %v635, 4294901760
        %637 = vmatmul.f32.gmra.mxu0 %v636
        %v638 = vpop.f32.mrf.mxu0
        %v639 = vadd.f32 %v607, %v638
        %v640 = vand.u32 %v279, 4294901760
        %v641 = vsub.f32 %v279, %v640
        %v642 = vand.u32 %v641, 4294901760
        %643 = vmatmul.f32.gmra.mxu0 %v642
        %v644 = vpop.f32.mrf.mxu0
        %v645 = vadd.f32 %v612, %v644
        %646 = vdwg.mxu0
        %647 = vmatpush.msra.mxu0 0.0
        %648 = vmatpush.msra.mxu0 0.0
        %649 = vmatpush.msra.mxu0 0.0
        %650 = vmatpush.msra.mxu0 0.0
        %651 = vmatpush.msra.mxu0 0.0
        %652 = vmatpush.msra.mxu0 0.0
        %653 = vmatpush.msra.mxu0 0.0
        %654 = vmatpush.msra.mxu0 0.0
        %655 = vmatpush.msra.mxu0 0.0
        %656 = vmatpush.msra.mxu0 0.0
        %657 = vmatpush.msra.mxu0 0.0
        %658 = vmatpush.msra.mxu0 0.0
        %v659 = vand.u32 %v263, 4294901760
        %v660 = vsub.f32 %v263, %v659
        %v661 = vand.u32 %v660, 4294901760
        %662 = vmatpush.msra.mxu0 %v661
        %v663 = vand.u32 %v261, 4294901760
        %v664 = vsub.f32 %v261, %v663
        %v665 = vand.u32 %v664, 4294901760
        %666 = vmatpush.msra.mxu0 %v665
        %v667 = vand.u32 %v259, 4294901760
        %v668 = vsub.f32 %v259, %v667
        %v669 = vand.u32 %v668, 4294901760
        %670 = vmatpush.msra.mxu0 %v669
        %v671 = vand.u32 %v257, 4294901760
        %v672 = vsub.f32 %v257, %v671
        %v673 = vand.u32 %v672, 4294901760
        %674 = vmatpush.msra.mxu0 %v673
        %v675 = vand.u32 %v276, 4294901760
        %676 = vmatmul.f32.gmra.mxu0 %v675
        %v677 = vpop.f32.mrf.mxu0
        %v678 = vadd.f32 %v639, %v677
        %v679 = vand.u32 %v279, 4294901760
        %680 = vmatmul.f32.gmra.mxu0 %v679
        %v681 = vpop.f32.mrf.mxu0
        %v682 = vadd.f32 %v645, %v681
        %683 = vdwg.mxu0
        %684 = vmatpush.msra.mxu0 0.0
        %685 = vmatpush.msra.mxu0 0.0
        %686 = vmatpush.msra.mxu0 0.0
        %687 = vmatpush.msra.mxu0 0.0
        %688 = vmatpush.msra.mxu0 0.0
        %689 = vmatpush.msra.mxu0 0.0
        %690 = vmatpush.msra.mxu0 0.0
        %691 = vmatpush.msra.mxu0 0.0
        %692 = vmatpush.msra.mxu0 0.0
        %693 = vmatpush.msra.mxu0 0.0
        %694 = vmatpush.msra.mxu0 0.0
        %695 = vmatpush.msra.mxu0 0.0
        %v696 = vand.u32 %v263, 4294901760
        %697 = vmatpush.msra.mxu0 %v696
        %v698 = vand.u32 %v261, 4294901760
        %699 = vmatpush.msra.mxu0 %v698
        %v700 = vand.u32 %v259, 4294901760
        %701 = vmatpush.msra.mxu0 %v700
        %v702 = vand.u32 %v257, 4294901760
        %703 = vmatpush.msra.mxu0 %v702
        %v704 = vand.u32 %v276, 4294901760
        %705 = vmatmul.f32.gmra.mxu0 %v704
        %v706 = vpop.f32.mrf.mxu0
        %v707 = vadd.f32 %v678, %v706
        %v708 = vand.u32 %v279, 4294901760
        %709 = vmatmul.f32.gmra.mxu0 %v708
        %v710 = vpop.f32.mrf.mxu0
        %v711 = vadd.f32 %v682, %v710
        %712 = vdwg.mxu0
        %v713 = vmul.f32 %v491, 0.5
        %v714 = vmul.f32 %v707, 0.5
        %v715 = vmul.f32 %v495, 0.5
        %v716 = vmul.f32 %v711, 0.5
        %v717 = vtanh.pop %v713
        %v718 = vtanh.pop %v714
        %v719 = vtanh.pop %v715
        %v720 = vtanh.pop %v716
        %v721 = vmul.f32 %v717, 0.5
        %v722 = vmul.f32 %v718, 0.5
        %v723 = vmul.f32 %v719, 0.5
        %v724 = vmul.f32 %v720, 0.5
        %v725 = vadd.f32 %v721, 0.5
        %v726 = vadd.f32 %v722, 0.5
        %v727 = vadd.f32 %v723, 0.5
        %v728 = vadd.f32 %v724, 0.5
        %729 = vst [vmem:[%s248] sm:$0xff] %v725
        %730 = vst [vmem:[%s248 + $0x8] sm:$0xff] %v726
        %v733 = vrot.slane %v728, 7
        %vm734 = vcmask 1040384
        %v735 = vsel %vm734, %v727, %v733
        %v737 = vlaneseq
        %vm738 = vcmp.ge.s32.totalorder %v737, 0
        %vm739 = vcmp.lt.s32.totalorder %v737, 256
        %vm740 = vmand %vm738, %vm739
        %741 = vst.msk [vmem:[%s241] sm:$0x3] %vm740, %v735
        %s742 = sand.u32 %s117, 1
        %s743 = scalar_lea.sflag [#allocation4], %s742
        %s744 = sand.u32 %s117, 1
        %s745 = smul.addr %s744, 2
        %s746 = scalar_lea.vmem [#allocation5], %s745
        %s747 = sand.u32 %s145, 1
        %s748 = scalar_lea.sflag [#allocation7], %s747
        %s749 = sand.u32 %s145, 1
        %s750 = smul.addr %s749, 16
        %s751 = scalar_lea.vmem [#allocation6], %s750
        // Predicated region
        $region37: #{tpu_custom_call.1} parent=31 // pred_check
          %p752 = pneg %p127
        $region38: #{tpu_custom_call.1} parent=31 // pred_check_branch
          %754 = sbr.rel (%p752) target = $region40
        $region39: #{tpu_custom_call.1} parent=31 // pred_region
          %s755 = smul.u32 2, %s30
          %757 = vsyncadd %s743, 0
          %s758 = smul.addr %s29, 2
          %s759 = sadd.s32 %s755, %s758
          %s760 = scalar_lea.hbm %s3, %s759
          %s762 = sshll.u32 %s746, 4
          %s763 = int_to_ptr.vmem [resolvable:$true] %s762
          %s764 = sshll.u32 %s760, 4
          %s765 = int_to_ptr.hbm [resolvable:$true] %s764
          %767 = dma.vmem_to_hbm [thread:$0]  %s763, 32, %s765, %s743
        $region40: #{tpu_custom_call.1} parent=31 // pred_fallthru
          _
        // Predicated region
        $region41: #{tpu_custom_call.1} parent=31 // pred_check
          %p768 = pneg %p155
        $region42: #{tpu_custom_call.1} parent=31 // pred_check_branch
          %770 = sbr.rel (%p768) target = $region44
        $region43: #{tpu_custom_call.1} parent=31 // pred_region
          %s771 = smul.u32 2, %s30
          %773 = vsyncadd %s748, 0
          %s774 = smul.addr %s29, 2
          %s775 = sadd.s32 %s771, %s774
          %s776 = smul.addr %s775, 8
          %s777 = scalar_lea.hbm %s4, %s776
          %s779 = sshll.u32 %s751, 4
          %s780 = int_to_ptr.vmem [resolvable:$true] %s779
          %s781 = sshll.u32 %s777, 4
          %s782 = int_to_ptr.hbm [resolvable:$true] %s781
          %784 = dma.vmem_to_hbm [thread:$0]  %s780, 256, %s782, %s748
        $region44: #{tpu_custom_call.1} parent=31 // pred_fallthru
          _
      $region32: #{tpu_custom_call.1} parent=5 // pred_fallthru
        _
      %p785 = scmp.le.s32.totalorder 2, %s20
      // Predicated region
      $region45: #{tpu_custom_call.1} parent=5 // pred_check
        %p786 = pneg %p785
      $region46: #{tpu_custom_call.1} parent=5 // pred_check_branch
        %788 = sbr.rel (%p786) target = $region48
      $region47: #{tpu_custom_call.1} parent=5 // pred_region
        %s789 = ssub.s32 %s20, 2
        // Predicated region
        $region49: #{tpu_custom_call.1} parent=47 // pred_check
          %p790 = pneg %p133
        $region50: #{tpu_custom_call.1} parent=47 // pred_check_branch
          %792 = sbr.rel (%p790) target = $region52
        $region51: #{tpu_custom_call.1} parent=47 // pred_region
          %s793 = sand.u32 %s118, 1
          %s794 = scalar_lea.sflag [#allocation4], %s793
          %s795 = sand.u32 %s118, 1
          %s796 = smul.addr %s795, 2
          %s797 = scalar_lea.vmem [#allocation5], %s796
          %799 = dma.done %s794, 32
        $region52: #{tpu_custom_call.1} parent=47 // pred_fallthru
          _
        // Predicated region
        $region53: #{tpu_custom_call.1} parent=47 // pred_check
          %p800 = pneg %p161
        $region54: #{tpu_custom_call.1} parent=47 // pred_check_branch
          %802 = sbr.rel (%p800) target = $region56
        $region55: #{tpu_custom_call.1} parent=47 // pred_region
          %s803 = sand.u32 %s146, 1
          %s804 = scalar_lea.sflag [#allocation7], %s803
          %s805 = sand.u32 %s146, 1
          %s806 = smul.addr %s805, 16
          %s807 = scalar_lea.vmem [#allocation6], %s806
          %809 = dma.done %s804, 256
        $region56: #{tpu_custom_call.1} parent=47 // pred_fallthru
          _
      $region48: #{tpu_custom_call.1} parent=5 // pred_fallthru
        _
    $region6: #{tpu_custom_call.1} parent=1 // loop_footer
      %s24 = sadd.s32 1, %s20
    $region7: #{tpu_custom_call.1} parent=1 // loop_footer_branch
      %19 = sbr.rel target = $region3
    $region8: #{tpu_custom_call.1} parent=1 // loop_exit
      _
    %810 = vsyncpa [#allocation3], 1
    %s811 = scalar_lea.sflag [#allocation3], 1
    %812 = vsyncpa %s811, 1
    %813 = vsyncpa [#allocation4], 1
    %s814 = scalar_lea.sflag [#allocation4], 1
    %815 = vsyncpa %s814, 1
    %816 = vsyncpa [#allocation7], 1
    %s817 = scalar_lea.sflag [#allocation7], 1
    %818 = vsyncpa %s817, 1

</llo_original>
